<compile_context>
chip_gen: v7x
topology: tpu7x:2x2x1
jax: 0.10.0
libtpu: 0.0.40
codegen_flags: <defaults>
</compile_context>

<pallas_src>
import jax
import jax.numpy as jnp
from jax.experimental import pallas as pl
from jax.experimental.pallas import tpu as pltpu

# ----- module hyper-params (small, synthetic) -----
LEVEL_DIM = 2
T_RES = 12
X_RES = 10
Y_RES = 10
# TODO(synk): upsample=True path (bilinear 2x interpolate of the grid) not implemented.

N = 16           # batch of query points
TN = 16          # batch tile == N  ->  grid=(1,)  (raise to 128/256 for large N)

G = T_RES * X_RES * Y_RES
G_PAD = ((G + 127) // 128) * 128       # pad lookup-table rows to lane multiple
OUT_DIM = 9 * LEVEL_DIM                # 18


def sparse_grid_kernel(inp_ref, table9_ref, out_ref):
    # inp_ref    : (TN, 3)            float32
    # table9_ref : (G_PAD, 9*L)       float32  (neighborhood-expanded table)
    # out_ref    : (TN, 9*L)          float32
    coords = inp_ref[...]                          # (TN, 3)
    t = coords[:, 0:1]
    x = coords[:, 1:2]
    y = coords[:, 2:3]

    # nearest-neighbor index, matching torch: trunc(coord*(res-1) + 0.5), clamp
    ti = jnp.clip(((T_RES - 1) * t + 0.5).astype(jnp.int32), 0, T_RES - 1)
    xi = jnp.clip(((X_RES - 1) * x + 0.5).astype(jnp.int32), 0, X_RES - 1)
    yi = jnp.clip(((Y_RES - 1) * y + 0.5).astype(jnp.int32), 0, Y_RES - 1)

    # flat center index into the (t, x, y)-major table
    flat = ti * (X_RES * Y_RES) + xi * Y_RES + yi  # (TN, 1)

    # one one-hot, one MXU matmul, one lane-contiguous store
    lane_ids = jax.lax.broadcasted_iota(jnp.int32, (TN, G_PAD), 1)
    onehot = (lane_ids == flat).astype(jnp.float32)          # (TN, G_PAD)
    out_ref[...] = jnp.dot(onehot, table9_ref[...],
                           preferred_element_type=jnp.float32)


def build_table9(embeddings):
    """(T, X, Y, L) -> (G_PAD, 9*L): per-cell concat of the 9 clamped (x,y)
    neighbors, same (i, j) order as the PyTorch loop; zero-padded rows."""
    T, X, Y, L = embeddings.shape
    xs = jnp.arange(X)
    ys = jnp.arange(Y)
    feats = []
    for i in (-1, 0, 1):
        for j in (-1, 0, 1):
            vx = jnp.clip(xs + i, 0, X - 1)
            vy = jnp.clip(ys + j, 0, Y - 1)
            feats.append(embeddings[:, vx][:, :, vy])        # (T, X, Y, L)
    table9 = jnp.concatenate(feats, axis=-1).reshape(T * X * Y, 9 * L)
    return jnp.pad(table9, ((0, G_PAD - T * X * Y), (0, 0)))


@jax.jit
def sparse_grid_forward(inputs, embeddings):
    """inputs: (N, 3) f32, embeddings: (T, X, Y, L) f32 -> (N, 9*L) f32."""
    table9 = build_table9(embeddings)                        # (G_PAD, 18) ~92 KB
    n = inputs.shape[0]
    assert n % TN == 0

    return pl.pallas_call(
        sparse_grid_kernel,
        out_shape=jax.ShapeDtypeStruct((n, OUT_DIM), jnp.float32),
        grid_spec=pltpu.PrefetchScalarGridSpec(
            num_scalar_prefetch=0,
            grid=(n // TN,),               # == (1,) here: no grid-step overhead
            in_specs=[
                pl.BlockSpec((TN, 3), lambda i: (i, 0)),
                # constant index_map: table resident for the whole call
                pl.BlockSpec((G_PAD, OUT_DIM), lambda i: (0, 0)),
            ],
            out_specs=pl.BlockSpec((TN, OUT_DIM), lambda i: (i, 0)),
        ),
        compiler_params=pltpu.CompilerParams(
            dimension_semantics=("parallel",)),
    )(inputs, table9)


def sparse_grid_ref(inputs, embeddings):
    """Pure-JAX reference mirroring the PyTorch forward."""
    t = inputs[:, 0]
    x = inputs[:, 1]
    y = inputs[:, 2]
    ti = jnp.clip(((T_RES - 1) * t + 0.5).astype(jnp.int32), 0, T_RES - 1)
    xi = jnp.clip(((X_RES - 1) * x + 0.5).astype(jnp.int32), 0, X_RES - 1)
    yi = jnp.clip(((Y_RES - 1) * y + 0.5).astype(jnp.int32), 0, Y_RES - 1)
    feats = []
    for i in (-1, 0, 1):
        for j in (-1, 0, 1):
            vx = jnp.clip(xi + i, 0, X_RES - 1)
            vy = jnp.clip(yi + j, 0, Y_RES - 1)
            feats.append(embeddings[ti, vx, vy, :])
    return jnp.concatenate(feats, axis=1)


if __name__ == "__main__":
    key = jax.random.PRNGKey(0)
    k_emb, k_in = jax.random.split(key)

    # deterministic parameter init: uniform(-1e-4, 1e-4) like reset_parameters
    embeddings = jax.random.uniform(
        k_emb, (T_RES, X_RES, Y_RES, LEVEL_DIM),
        dtype=jnp.float32, minval=-1e-4, maxval=1e-4)

    # query coords in [0, 1]
    inputs = jax.random.uniform(k_in, (N, 3), dtype=jnp.float32)

    out = sparse_grid_forward(inputs, embeddings)
    out = jax.block_until_ready(out)

    ref = sparse_grid_ref(inputs, embeddings)
    assert out.shape == (N, OUT_DIM)
    assert jnp.allclose(out, ref, atol=1e-7), "mismatch vs reference"

    print("KERNEL_OK")
</pallas_src>

<mosaic_0001>
module attributes {stable_mosaic.version = 11 : i64} {
  func.func @sparse_grid_kernel(%arg0: i32, %arg1: memref<16x3xf32, #tpu.memory_space<vmem>>, %arg2: memref<1280x18xf32, #tpu.memory_space<vmem>>, %arg3: memref<16x18xf32, #tpu.memory_space<vmem>>) attributes {dimension_semantics = [#tpu.dimension_semantics<parallel>], iteration_bounds = array<i64: 1>, scalar_prefetch = 0 : i64, scratch_operands = 0 : i64, tpu.core_type = #tpu.core_type<tc>, window_params = [{transform_indices = @transform_0, window_bounds = array<i64: 16, 3>}, {pipeline_mode = #tpu.pipeline_mode<synchronous>, transform_indices = @transform_1, window_bounds = array<i64: 1280, 18>}, {transform_indices = @transform_2, window_bounds = array<i64: 16, 18>}]} {
    %c0 = arith.constant 0 : index
    %c0_0 = arith.constant 0 : index
    %0 = vector.load %arg1[%c0, %c0_0] : memref<16x3xf32, #tpu.memory_space<vmem>>, vector<16x3xf32>
    %1 = vector.extract_strided_slice %0 {offsets = [0, 0], sizes = [16, 1], strides = [1, 1]} : vector<16x3xf32> to vector<16x1xf32>
    %2 = vector.extract_strided_slice %0 {offsets = [0, 1], sizes = [16, 1], strides = [1, 1]} : vector<16x3xf32> to vector<16x1xf32>
    %3 = vector.extract_strided_slice %0 {offsets = [0, 2], sizes = [16, 1], strides = [1, 1]} : vector<16x3xf32> to vector<16x1xf32>
    %cst = arith.constant 1.100000e+01 : f32
    %4 = vector.broadcast %cst : f32 to vector<16x1xf32>
    %5 = arith.mulf %4, %1 : vector<16x1xf32>
    %cst_1 = arith.constant 5.000000e-01 : f32
    %6 = vector.broadcast %cst_1 : f32 to vector<16x1xf32>
    %7 = arith.addf %5, %6 : vector<16x1xf32>
    %8 = arith.fptosi %7 : vector<16x1xf32> to vector<16x1xi32>
    %c0_i32 = arith.constant 0 : i32
    %c11_i32 = arith.constant 11 : i32
    %9 = vector.broadcast %c0_i32 : i32 to vector<16x1xi32>
    %10 = arith.maxsi %9, %8 : vector<16x1xi32>
    %11 = vector.broadcast %c11_i32 : i32 to vector<16x1xi32>
    %12 = arith.minsi %11, %10 : vector<16x1xi32>
    %cst_2 = arith.constant 9.000000e+00 : f32
    %13 = vector.broadcast %cst_2 : f32 to vector<16x1xf32>
    %14 = arith.mulf %13, %2 : vector<16x1xf32>
    %cst_3 = arith.constant 5.000000e-01 : f32
    %15 = vector.broadcast %cst_3 : f32 to vector<16x1xf32>
    %16 = arith.addf %14, %15 : vector<16x1xf32>
    %17 = arith.fptosi %16 : vector<16x1xf32> to vector<16x1xi32>
    %c0_i32_4 = arith.constant 0 : i32
    %c9_i32 = arith.constant 9 : i32
    %18 = vector.broadcast %c0_i32_4 : i32 to vector<16x1xi32>
    %19 = arith.maxsi %18, %17 : vector<16x1xi32>
    %20 = vector.broadcast %c9_i32 : i32 to vector<16x1xi32>
    %21 = arith.minsi %20, %19 : vector<16x1xi32>
    %cst_5 = arith.constant 9.000000e+00 : f32
    %22 = vector.broadcast %cst_5 : f32 to vector<16x1xf32>
    %23 = arith.mulf %22, %3 : vector<16x1xf32>
    %cst_6 = arith.constant 5.000000e-01 : f32
    %24 = vector.broadcast %cst_6 : f32 to vector<16x1xf32>
    %25 = arith.addf %23, %24 : vector<16x1xf32>
    %26 = arith.fptosi %25 : vector<16x1xf32> to vector<16x1xi32>
    %c0_i32_7 = arith.constant 0 : i32
    %c9_i32_8 = arith.constant 9 : i32
    %27 = vector.broadcast %c0_i32_7 : i32 to vector<16x1xi32>
    %28 = arith.maxsi %27, %26 : vector<16x1xi32>
    %29 = vector.broadcast %c9_i32_8 : i32 to vector<16x1xi32>
    %30 = arith.minsi %29, %28 : vector<16x1xi32>
    %c100_i32 = arith.constant 100 : i32
    %31 = vector.broadcast %c100_i32 : i32 to vector<16x1xi32>
    %32 = arith.muli %12, %31 : vector<16x1xi32>
    %c10_i32 = arith.constant 10 : i32
    %33 = vector.broadcast %c10_i32 : i32 to vector<16x1xi32>
    %34 = arith.muli %21, %33 : vector<16x1xi32>
    %35 = arith.addi %32, %34 : vector<16x1xi32>
    %36 = arith.addi %35, %30 : vector<16x1xi32>
    %37 = tpu.iota {dimensions = array<i32: 1>} : vector<16x1280xi32>
    %38 = vector.broadcast %36 : vector<16x1xi32> to vector<16x1280xi32>
    %39 = arith.cmpi eq, %37, %38 : vector<16x1280xi32>
    %40 = arith.extui %39 : vector<16x1280xi1> to vector<16x1280xi32>
    %41 = arith.sitofp %40 : vector<16x1280xi32> to vector<16x1280xf32>
    %c0_9 = arith.constant 0 : index
    %c0_10 = arith.constant 0 : index
    %42 = vector.load %arg2[%c0_9, %c0_10] : memref<1280x18xf32, #tpu.memory_space<vmem>>, vector<1280x18xf32>
    %cst_11 = arith.constant dense<0.000000e+00> : vector<16x18xf32>
    %43 = tpu.matmul %41, %42, %cst_11 {dimension_numbers = #tpu.dot_dimension_numbers<[1], [0], [0], [1], [0, 0, 1, 1], [], []>} : vector<16x1280xf32>, vector<1280x18xf32>, vector<16x18xf32> -> vector<16x18xf32>
    %c0_12 = arith.constant 0 : index
    %c0_13 = arith.constant 0 : index
    %44 = vector.load %arg3[%c0_12, %c0_13] : memref<16x18xf32, #tpu.memory_space<vmem>>, vector<16x18xf32>
    tpu.vector_store %arg3[%c0_12, %c0_13], %43 {strides = array<i32>} : memref<16x18xf32, #tpu.memory_space<vmem>>, vector<16x18xf32>,
    return
  }
  func.func @transform_0(%arg0: i32) -> (i32, i32) {
    %c0_i32 = arith.constant 0 : i32
    %c0_i32_0 = arith.constant 0 : i32
    return %arg0, %c0_i32 : i32, i32
  }
  func.func @transform_1(%arg0: i32) -> (i32, i32) {
    %c0_i32 = arith.constant 0 : i32
    %c0_i32_0 = arith.constant 0 : i32
    %c0_i32_1 = arith.constant 0 : i32
    return %c0_i32, %c0_i32_0 : i32, i32
  }
  func.func @transform_2(%arg0: i32) -> (i32, i32) {
    %c0_i32 = arith.constant 0 : i32
    %c0_i32_0 = arith.constant 0 : i32
    return %arg0, %c0_i32 : i32, i32
  }
}

</mosaic_0001>

<llo_original>
// kernel: sparse_grid_forward.1
$region0: #{sparse_grid_forward.1}
  #allocation0 [shape = 'u32[]', space=smem, size = 0x4, offset = 0x4, fixed_abs, tag = 'smem constant byte address 0x4 - core index']
  #allocation1 [shape = 'u32[144,128]{1,0:T(1,128)}', space=vmem, size = 0x12000, scoped, tag = 'internal scratch']
  %s0 = inlined_call_operand.vmem [shape: f32[16,3], index: 0, kind: input, shape index: {}]
  %s1 = inlined_call_operand.vmem [shape: f32[1280,18], index: 1, kind: input, shape index: {}]
  %s2 = inlined_call_operand.hbm [shape: f32[16,18], index: 2, kind: output, shape index: {}]
  %s3 = sld [smem:[#allocation0]]
  $region18: #{sparse_grid_forward.1} parent=0
    _
  %s5 = ssub.s32 1, %s3
  %s6 = scalar_select 0, %s5, %s3
  $region1: #{sparse_grid_forward.1} parent=0
    #allocation2 [shape = 'u8[8192]{0}', space=vmem, size = 0x2000, scoped, tag = 'output window, operand 0, single buffered']
    #allocation3 [shape = 's32[1]{0}', space=sflag, size = 0x4, scoped, tag = 'scoped memory for sparse_grid_forward.1']
    %7 = vsyncpa [#allocation3], 0
    // Predicated region
    $region2: #{sparse_grid_forward.1} parent=1 // pred_check
      _
    $region3: #{sparse_grid_forward.1} parent=1 // pred_check_branch
      %9 = sbr.rel (0) target = $region5
    $region4: #{sparse_grid_forward.1} parent=1 // pred_region
      _
    $region5: #{sparse_grid_forward.1} parent=1 // pred_fallthru
      _
    // Predicated region
    $region6: #{sparse_grid_forward.1} parent=1 // pred_check
      _
    $region7: #{sparse_grid_forward.1} parent=1 // pred_check_branch
      %11 = sbr.rel (0) target = $region9
    $region8: #{sparse_grid_forward.1} parent=1 // pred_region
      _
    $region9: #{sparse_grid_forward.1} parent=1 // pred_fallthru
      _
    %v12 = vld [vmem:[%s0] sm:$0xff]
    %v13 = vld [vmem:[%s0 + $0x8] sm:$0xff]
    %v14 = vmul.f32 %v12, 11.0
    %v15 = vmul.f32 %v13, 11.0
    %v16 = vadd.f32 %v14, 0.5
    %v17 = vadd.f32 %v15, 0.5
    %v18 = vcvt.f32.s32.to.zero.pseudo %v16
    %v19 = vcvt.f32.s32.to.zero.pseudo %v17
    %vm20 = vcmp.gt.s32.totalorder %v18, 0
    %v21 = vsel %vm20, %v18, 0
    %vm22 = vcmp.gt.s32.totalorder %v19, 0
    %v23 = vsel %vm22, %v19, 0
    %vm24 = vcmp.lt.s32.totalorder %v21, 11
    %v25 = vsel %vm24, %v21, 11
    %vm26 = vcmp.lt.s32.totalorder %v23, 11
    %v27 = vsel %vm26, %v23, 11
    %v28 = vmul.f32 %v12, 9.0
    %v29 = vmul.f32 %v13, 9.0
    %v30 = vadd.f32 %v28, 0.5
    %v31 = vadd.f32 %v29, 0.5
    %v32 = vcvt.f32.s32.to.zero.pseudo %v30
    %v33 = vcvt.f32.s32.to.zero.pseudo %v31
    %vm34 = vcmp.gt.s32.totalorder %v32, 0
    %v35 = vsel %vm34, %v32, 0
    %vm36 = vcmp.gt.s32.totalorder %v33, 0
    %v37 = vsel %vm36, %v33, 0
    %vm38 = vcmp.lt.s32.totalorder %v35, 9
    %v39 = vsel %vm38, %v35, 9
    %vm40 = vcmp.lt.s32.totalorder %v37, 9
    %v41 = vsel %vm40, %v37, 9
    %v42 = vmul.u32 %v25, 100
    %v43 = vmul.u32 %v27, 100
    %v44 = vmul.u32 %v39, 10
    %v45 = vmul.u32 %v41, 10
    %46 = vrot.lane.b32.xlu0 %v44, 127
    %v47 = vpop.permute.xlu0 %46
    %48 = vrot.lane.b32.xlu0 %v45, 127
    %v49 = vpop.permute.xlu0 %48
    %v50 = vadd.s32 %v42, %v47
    %v51 = vadd.s32 %v43, %v49
    %52 = vrot.lane.b32.xlu0 %v39, 126
    %v53 = vpop.permute.xlu0 %52
    %54 = vrot.lane.b32.xlu0 %v41, 126
    %v55 = vpop.permute.xlu0 %54
    %v56 = vadd.s32 %v50, %v53
    %v57 = vadd.s32 %v51, %v55
    %v58 = vlaneseq
    %v59 = vand.u32 %v58, 127
    %v60 = vadd.s32 %v59, 128
    %v61 = vadd.s32 %v59, 256
    %v62 = vadd.s32 %v59, 384
    %v63 = vadd.s32 %v59, 512
    %v64 = vadd.s32 %v59, 640
    %v65 = vadd.s32 %v59, 768
    %v66 = vadd.s32 %v59, 896
    %v67 = vadd.s32 %v59, 1024
    %v68 = vadd.s32 %v59, 1152
    %69 = vset.pattern.permute.xlu0 0
    %70 = vperm.xlu0 %69, %v56
    %v71 = vpop.permute.xlu0 %70
    %72 = vset.pattern.permute.xlu0 0
    %73 = vperm.xlu0 %72, %v57
    %v74 = vpop.permute.xlu0 %73
    %vm75 = vcmp.eq.s32.totalorder %v59, %v71
    %vm76 = vcmp.eq.s32.totalorder %v60, %v71
    %vm77 = vcmp.eq.s32.totalorder %v61, %v71
    %vm78 = vcmp.eq.s32.totalorder %v62, %v71
    %vm79 = vcmp.eq.s32.totalorder %v63, %v71
    %vm80 = vcmp.eq.s32.totalorder %v64, %v71
    %vm81 = vcmp.eq.s32.totalorder %v65, %v71
    %vm82 = vcmp.eq.s32.totalorder %v66, %v71
    %vm83 = vcmp.eq.s32.totalorder %v67, %v71
    %vm84 = vcmp.eq.s32.totalorder %v68, %v71
    %vm85 = vcmp.eq.s32.totalorder %v59, %v74
    %vm86 = vcmp.eq.s32.totalorder %v60, %v74
    %vm87 = vcmp.eq.s32.totalorder %v61, %v74
    %vm88 = vcmp.eq.s32.totalorder %v62, %v74
    %vm89 = vcmp.eq.s32.totalorder %v63, %v74
    %vm90 = vcmp.eq.s32.totalorder %v64, %v74
    %vm91 = vcmp.eq.s32.totalorder %v65, %v74
    %vm92 = vcmp.eq.s32.totalorder %v66, %v74
    %vm93 = vcmp.eq.s32.totalorder %v67, %v74
    %vm94 = vcmp.eq.s32.totalorder %v68, %v74
    %v95 = vsel %vm75, 1, 0
    %v96 = vsel %vm76, 1, 0
    %v97 = vsel %vm77, 1, 0
    %v98 = vsel %vm78, 1, 0
    %v99 = vsel %vm79, 1, 0
    %v100 = vsel %vm80, 1, 0
    %v101 = vsel %vm81, 1, 0
    %v102 = vsel %vm82, 1, 0
    %v103 = vsel %vm83, 1, 0
    %v104 = vsel %vm84, 1, 0
    %v105 = vsel %vm85, 1, 0
    %v106 = vsel %vm86, 1, 0
    %v107 = vsel %vm87, 1, 0
    %v108 = vsel %vm88, 1, 0
    %v109 = vsel %vm89, 1, 0
    %v110 = vsel %vm90, 1, 0
    %v111 = vsel %vm91, 1, 0
    %v112 = vsel %vm92, 1, 0
    %v113 = vsel %vm93, 1, 0
    %v114 = vsel %vm94, 1, 0
    %v115 = vcvt.s32.f32 %v95
    %v116 = vcvt.s32.f32 %v96
    %v117 = vcvt.s32.f32 %v97
    %v118 = vcvt.s32.f32 %v98
    %v119 = vcvt.s32.f32 %v99
    %v120 = vcvt.s32.f32 %v100
    %v121 = vcvt.s32.f32 %v101
    %v122 = vcvt.s32.f32 %v102
    %v123 = vcvt.s32.f32 %v103
    %v124 = vcvt.s32.f32 %v104
    %v125 = vcvt.s32.f32 %v105
    %v126 = vcvt.s32.f32 %v106
    %v127 = vcvt.s32.f32 %v107
    %v128 = vcvt.s32.f32 %v108
    %v129 = vcvt.s32.f32 %v109
    %v130 = vcvt.s32.f32 %v110
    %v131 = vcvt.s32.f32 %v111
    %v132 = vcvt.s32.f32 %v112
    %v133 = vcvt.s32.f32 %v113
    %v134 = vcvt.s32.f32 %v114
    %v135 = vld [vmem:[%s1] sm:$0xff]
    %v136 = vld [vmem:[%s1 + $0x8] sm:$0xff]
    %v137 = vld [vmem:[%s1 + $0x10] sm:$0xff]
    %v138 = vld [vmem:[%s1 + $0x18] sm:$0xff]
    %v139 = vld [vmem:[%s1 + $0x20] sm:$0xff]
    %v140 = vld [vmem:[%s1 + $0x28] sm:$0xff]
    %v141 = vld [vmem:[%s1 + $0x30] sm:$0xff]
    %v142 = vld [vmem:[%s1 + $0x38] sm:$0xff]
    %v143 = vld [vmem:[%s1 + $0x40] sm:$0xff]
    %v144 = vld [vmem:[%s1 + $0x48] sm:$0xff]
    %v145 = vld [vmem:[%s1 + $0x50] sm:$0xff]
    %v146 = vld [vmem:[%s1 + $0x58] sm:$0xff]
    %v147 = vld [vmem:[%s1 + $0x60] sm:$0xff]
    %v148 = vld [vmem:[%s1 + $0x68] sm:$0xff]
    %v149 = vld [vmem:[%s1 + $0x70] sm:$0xff]
    %v150 = vld [vmem:[%s1 + $0x78] sm:$0xff]
    %v151 = vld [vmem:[%s1 + $0x80] sm:$0xff]
    %v152 = vld [vmem:[%s1 + $0x88] sm:$0xff]
    %v153 = vld [vmem:[%s1 + $0x90] sm:$0xff]
    %v154 = vld [vmem:[%s1 + $0x98] sm:$0xff]
    %v155 = vld [vmem:[%s1 + $0xa0] sm:$0xff]
    %v156 = vld [vmem:[%s1 + $0xa8] sm:$0xff]
    %v157 = vld [vmem:[%s1 + $0xb0] sm:$0xff]
    %v158 = vld [vmem:[%s1 + $0xb8] sm:$0xff]
    %v159 = vld [vmem:[%s1 + $0xc0] sm:$0xff]
    %v160 = vld [vmem:[%s1 + $0xc8] sm:$0xff]
    %v161 = vld [vmem:[%s1 + $0xd0] sm:$0xff]
    %v162 = vld [vmem:[%s1 + $0xd8] sm:$0xff]
    %v163 = vld [vmem:[%s1 + $0xe0] sm:$0xff]
    %v164 = vld [vmem:[%s1 + $0xe8] sm:$0xff]
    %v165 = vld [vmem:[%s1 + $0xf0] sm:$0xff]
    %v166 = vld [vmem:[%s1 + $0xf8] sm:$0xff]
    %v167 = vld [vmem:[%s1 + $0x100] sm:$0xff]
    %v168 = vld [vmem:[%s1 + $0x108] sm:$0xff]
    %v169 = vld [vmem:[%s1 + $0x110] sm:$0xff]
    %v170 = vld [vmem:[%s1 + $0x118] sm:$0xff]
    %v171 = vld [vmem:[%s1 + $0x120] sm:$0xff]
    %v172 = vld [vmem:[%s1 + $0x128] sm:$0xff]
    %v173 = vld [vmem:[%s1 + $0x130] sm:$0xff]
    %v174 = vld [vmem:[%s1 + $0x138] sm:$0xff]
    %v175 = vld [vmem:[%s1 + $0x140] sm:$0xff]
    %v176 = vld [vmem:[%s1 + $0x148] sm:$0xff]
    %v177 = vld [vmem:[%s1 + $0x150] sm:$0xff]
    %v178 = vld [vmem:[%s1 + $0x158] sm:$0xff]
    %v179 = vld [vmem:[%s1 + $0x160] sm:$0xff]
    %v180 = vld [vmem:[%s1 + $0x168] sm:$0xff]
    %v181 = vld [vmem:[%s1 + $0x170] sm:$0xff]
    %v182 = vld [vmem:[%s1 + $0x178] sm:$0xff]
    %v183 = vld [vmem:[%s1 + $0x180] sm:$0xff]
    %v184 = vld [vmem:[%s1 + $0x188] sm:$0xff]
    %v185 = vld [vmem:[%s1 + $0x190] sm:$0xff]
    %v186 = vld [vmem:[%s1 + $0x198] sm:$0xff]
    %v187 = vld [vmem:[%s1 + $0x1a0] sm:$0xff]
    %v188 = vld [vmem:[%s1 + $0x1a8] sm:$0xff]
    %v189 = vld [vmem:[%s1 + $0x1b0] sm:$0xff]
    %v190 = vld [vmem:[%s1 + $0x1b8] sm:$0xff]
    %v191 = vld [vmem:[%s1 + $0x1c0] sm:$0xff]
    %v192 = vld [vmem:[%s1 + $0x1c8] sm:$0xff]
    %v193 = vld [vmem:[%s1 + $0x1d0] sm:$0xff]
    %v194 = vld [vmem:[%s1 + $0x1d8] sm:$0xff]
    %v195 = vld [vmem:[%s1 + $0x1e0] sm:$0xff]
    %v196 = vld [vmem:[%s1 + $0x1e8] sm:$0xff]
    %v197 = vld [vmem:[%s1 + $0x1f0] sm:$0xff]
    %v198 = vld [vmem:[%s1 + $0x1f8] sm:$0xff]
    %v199 = vld [vmem:[%s1 + $0x200] sm:$0xff]
    %v200 = vld [vmem:[%s1 + $0x208] sm:$0xff]
    %v201 = vld [vmem:[%s1 + $0x210] sm:$0xff]
    %v202 = vld [vmem:[%s1 + $0x218] sm:$0xff]
    %v203 = vld [vmem:[%s1 + $0x220] sm:$0xff]
    %v204 = vld [vmem:[%s1 + $0x228] sm:$0xff]
    %v205 = vld [vmem:[%s1 + $0x230] sm:$0xff]
    %v206 = vld [vmem:[%s1 + $0x238] sm:$0xff]
    %v207 = vld [vmem:[%s1 + $0x240] sm:$0xff]
    %v208 = vld [vmem:[%s1 + $0x248] sm:$0xff]
    %v209 = vld [vmem:[%s1 + $0x250] sm:$0xff]
    %v210 = vld [vmem:[%s1 + $0x258] sm:$0xff]
    %v211 = vld [vmem:[%s1 + $0x260] sm:$0xff]
    %v212 = vld [vmem:[%s1 + $0x268] sm:$0xff]
    %v213 = vld [vmem:[%s1 + $0x270] sm:$0xff]
    %v214 = vld [vmem:[%s1 + $0x278] sm:$0xff]
    %v215 = vld [vmem:[%s1 + $0x280] sm:$0xff]
    %v216 = vld [vmem:[%s1 + $0x288] sm:$0xff]
    %v217 = vld [vmem:[%s1 + $0x290] sm:$0xff]
    %v218 = vld [vmem:[%s1 + $0x298] sm:$0xff]
    %v219 = vld [vmem:[%s1 + $0x2a0] sm:$0xff]
    %v220 = vld [vmem:[%s1 + $0x2a8] sm:$0xff]
    %v221 = vld [vmem:[%s1 + $0x2b0] sm:$0xff]
    %v222 = vld [vmem:[%s1 + $0x2b8] sm:$0xff]
    %v223 = vld [vmem:[%s1 + $0x2c0] sm:$0xff]
    %v224 = vld [vmem:[%s1 + $0x2c8] sm:$0xff]
    %v225 = vld [vmem:[%s1 + $0x2d0] sm:$0xff]
    %v226 = vld [vmem:[%s1 + $0x2d8] sm:$0xff]
    %v227 = vld [vmem:[%s1 + $0x2e0] sm:$0xff]
    %v228 = vld [vmem:[%s1 + $0x2e8] sm:$0xff]
    %v229 = vld [vmem:[%s1 + $0x2f0] sm:$0xff]
    %v230 = vld [vmem:[%s1 + $0x2f8] sm:$0xff]
    %v231 = vld [vmem:[%s1 + $0x300] sm:$0xff]
    %v232 = vld [vmem:[%s1 + $0x308] sm:$0xff]
    %v233 = vld [vmem:[%s1 + $0x310] sm:$0xff]
    %v234 = vld [vmem:[%s1 + $0x318] sm:$0xff]
    %v235 = vld [vmem:[%s1 + $0x320] sm:$0xff]
    %v236 = vld [vmem:[%s1 + $0x328] sm:$0xff]
    %v237 = vld [vmem:[%s1 + $0x330] sm:$0xff]
    %v238 = vld [vmem:[%s1 + $0x338] sm:$0xff]
    %v239 = vld [vmem:[%s1 + $0x340] sm:$0xff]
    %v240 = vld [vmem:[%s1 + $0x348] sm:$0xff]
    %v241 = vld [vmem:[%s1 + $0x350] sm:$0xff]
    %v242 = vld [vmem:[%s1 + $0x358] sm:$0xff]
    %v243 = vld [vmem:[%s1 + $0x360] sm:$0xff]
    %v244 = vld [vmem:[%s1 + $0x368] sm:$0xff]
    %v245 = vld [vmem:[%s1 + $0x370] sm:$0xff]
    %v246 = vld [vmem:[%s1 + $0x378] sm:$0xff]
    %v247 = vld [vmem:[%s1 + $0x380] sm:$0xff]
    %v248 = vld [vmem:[%s1 + $0x388] sm:$0xff]
    %v249 = vld [vmem:[%s1 + $0x390] sm:$0xff]
    %v250 = vld [vmem:[%s1 + $0x398] sm:$0xff]
    %v251 = vld [vmem:[%s1 + $0x3a0] sm:$0xff]
    %v252 = vld [vmem:[%s1 + $0x3a8] sm:$0xff]
    %v253 = vld [vmem:[%s1 + $0x3b0] sm:$0xff]
    %v254 = vld [vmem:[%s1 + $0x3b8] sm:$0xff]
    %v255 = vld [vmem:[%s1 + $0x3c0] sm:$0xff]
    %v256 = vld [vmem:[%s1 + $0x3c8] sm:$0xff]
    %v257 = vld [vmem:[%s1 + $0x3d0] sm:$0xff]
    %v258 = vld [vmem:[%s1 + $0x3d8] sm:$0xff]
    %v259 = vld [vmem:[%s1 + $0x3e0] sm:$0xff]
    %v260 = vld [vmem:[%s1 + $0x3e8] sm:$0xff]
    %v261 = vld [vmem:[%s1 + $0x3f0] sm:$0xff]
    %v262 = vld [vmem:[%s1 + $0x3f8] sm:$0xff]
    %v263 = vld [vmem:[%s1 + $0x400] sm:$0xff]
    %v264 = vld [vmem:[%s1 + $0x408] sm:$0xff]
    %v265 = vld [vmem:[%s1 + $0x410] sm:$0xff]
    %v266 = vld [vmem:[%s1 + $0x418] sm:$0xff]
    %v267 = vld [vmem:[%s1 + $0x420] sm:$0xff]
    %v268 = vld [vmem:[%s1 + $0x428] sm:$0xff]
    %v269 = vld [vmem:[%s1 + $0x430] sm:$0xff]
    %v270 = vld [vmem:[%s1 + $0x438] sm:$0xff]
    %v271 = vld [vmem:[%s1 + $0x440] sm:$0xff]
    %v272 = vld [vmem:[%s1 + $0x448] sm:$0xff]
    %v273 = vld [vmem:[%s1 + $0x450] sm:$0xff]
    %v274 = vld [vmem:[%s1 + $0x458] sm:$0xff]
    %v275 = vld [vmem:[%s1 + $0x460] sm:$0xff]
    %v276 = vld [vmem:[%s1 + $0x468] sm:$0xff]
    %v277 = vld [vmem:[%s1 + $0x470] sm:$0xff]
    %v278 = vld [vmem:[%s1 + $0x478] sm:$0xff]
    %v279 = vld [vmem:[%s1 + $0x480] sm:$0xff]
    %v280 = vld [vmem:[%s1 + $0x488] sm:$0xff]
    %v281 = vld [vmem:[%s1 + $0x490] sm:$0xff]
    %v282 = vld [vmem:[%s1 + $0x498] sm:$0xff]
    %v283 = vld [vmem:[%s1 + $0x4a0] sm:$0xff]
    %v284 = vld [vmem:[%s1 + $0x4a8] sm:$0xff]
    %v285 = vld [vmem:[%s1 + $0x4b0] sm:$0xff]
    %v286 = vld [vmem:[%s1 + $0x4b8] sm:$0xff]
    %v287 = vld [vmem:[%s1 + $0x4c0] sm:$0xff]
    %v288 = vld [vmem:[%s1 + $0x4c8] sm:$0xff]
    %v289 = vld [vmem:[%s1 + $0x4d0] sm:$0xff]
    %v290 = vld [vmem:[%s1 + $0x4d8] sm:$0xff]
    %v291 = vld [vmem:[%s1 + $0x4e0] sm:$0xff]
    %v292 = vld [vmem:[%s1 + $0x4e8] sm:$0xff]
    %v293 = vld [vmem:[%s1 + $0x4f0] sm:$0xff]
    %v294 = vld [vmem:[%s1 + $0x4f8] sm:$0xff]
    %295 = vmatprep.subr.mxu0 0.0
    %296 = vmatpush1.msra.mxu0 %v135
    %297 = vmatprep.subr.mxu0 0.0
    %298 = vmatpush1.msra.mxu0 %v136
    %299 = vmatprep.subr.mxu0 0.0
    %300 = vmatpush1.msra.mxu0 %v137
    %301 = vmatprep.subr.mxu0 0.0
    %302 = vmatpush1.msra.mxu0 %v138
    %303 = vmatprep.subr.mxu0 0.0
    %304 = vmatpush1.msra.mxu0 %v139
    %305 = vmatprep.subr.mxu0 0.0
    %306 = vmatpush1.msra.mxu0 %v140
    %307 = vmatprep.subr.mxu0 0.0
    %308 = vmatpush1.msra.mxu0 %v141
    %309 = vmatprep.subr.mxu0 0.0
    %310 = vmatpush1.msra.mxu0 %v142
    %311 = vmatprep.subr.mxu0 0.0
    %312 = vmatpush1.msra.mxu0 %v143
    %313 = vmatprep.subr.mxu0 0.0
    %314 = vmatpush1.msra.mxu0 %v144
    %315 = vmatprep.subr.mxu0 0.0
    %316 = vmatpush1.msra.mxu0 %v145
    %317 = vmatprep.subr.mxu0 0.0
    %318 = vmatpush1.msra.mxu0 %v146
    %319 = vmatprep.subr.mxu0 0.0
    %320 = vmatpush1.msra.mxu0 %v147
    %321 = vmatprep.subr.mxu0 0.0
    %322 = vmatpush1.msra.mxu0 %v148
    %323 = vmatprep.subr.mxu0 0.0
    %324 = vmatpush1.msra.mxu0 %v149
    %325 = vmatprep.subr.mxu0 0.0
    %326 = vmatpush1.msra.mxu0 %v150
    %327 = vmatprep.subr.mxu0 0.0
    %328 = vmatpush1.msra.mxu0 %v151
    %329 = vmatprep.subr.mxu0 0.0
    %330 = vmatpush1.msra.mxu0 %v152
    %331 = vmatprep.subr.mxu0 0.0
    %332 = vmatpush1.msra.mxu0 %v153
    %333 = vmatprep.subr.mxu0 0.0
    %334 = vmatpush1.msra.mxu0 %v154
    %335 = vmatprep.subr.mxu0 0.0
    %336 = vmatpush1.msra.mxu0 %v155
    %337 = vmatprep.subr.mxu0 0.0
    %338 = vmatpush1.msra.mxu0 %v156
    %339 = vmatprep.subr.mxu0 0.0
    %340 = vmatpush1.msra.mxu0 %v157
    %341 = vmatprep.subr.mxu0 0.0
    %342 = vmatpush1.msra.mxu0 %v158
    %343 = vmatprep.subr.mxu0 0.0
    %344 = vmatpush1.msra.mxu0 %v159
    %345 = vmatprep.subr.mxu0 0.0
    %346 = vmatpush1.msra.mxu0 %v160
    %347 = vmatprep.subr.mxu0 0.0
    %348 = vmatpush1.msra.mxu0 %v161
    %349 = vmatprep.subr.mxu0 0.0
    %350 = vmatpush1.msra.mxu0 %v162
    %351 = vmatprep.subr.mxu0 0.0
    %352 = vmatpush1.msra.mxu0 %v163
    %353 = vmatprep.subr.mxu0 0.0
    %354 = vmatpush1.msra.mxu0 %v164
    %355 = vmatprep.subr.mxu0 0.0
    %356 = vmatpush1.msra.mxu0 %v165
    %357 = vmatprep.subr.mxu0 0.0
    %358 = vmatpush1.msra.mxu0 %v166
    %359 = vmatprep.mubr.f32.mxu0 %v116
    %360 = vmatmul.mubr.f32.gmra.mrb[0].mxu0 %v115
    %v361 = vpop.f32.mrb[0].mxu0
    %v362 = vadd.f32 0.0, %v361
    %v363 = vpop.f32.mrb[0].mxu0
    %364 = vmatprep.mubr.f32.mxu0 %v126
    %365 = vmatmul.mubr.f32.gmra.mrb[0].mxu0 %v125
    %v366 = vpop.f32.mrb[0].mxu0
    %v367 = vadd.f32 0.0, %v366
    %v368 = vpop.f32.mrb[0].mxu0
    %369 = vdwg.mxu0
    %370 = vmatprep.subr.mxu0 0.0
    %371 = vmatpush1.msra.mxu0 %v167
    %372 = vmatprep.subr.mxu0 0.0
    %373 = vmatpush1.msra.mxu0 %v168
    %374 = vmatprep.subr.mxu0 0.0
    %375 = vmatpush1.msra.mxu0 %v169
    %376 = vmatprep.subr.mxu0 0.0
    %377 = vmatpush1.msra.mxu0 %v170
    %378 = vmatprep.subr.mxu0 0.0
    %379 = vmatpush1.msra.mxu0 %v171
    %380 = vmatprep.subr.mxu0 0.0
    %381 = vmatpush1.msra.mxu0 %v172
    %382 = vmatprep.subr.mxu0 0.0
    %383 = vmatpush1.msra.mxu0 %v173
    %384 = vmatprep.subr.mxu0 0.0
    %385 = vmatpush1.msra.mxu0 %v174
    %386 = vmatprep.subr.mxu0 0.0
    %387 = vmatpush1.msra.mxu0 %v175
    %388 = vmatprep.subr.mxu0 0.0
    %389 = vmatpush1.msra.mxu0 %v176
    %390 = vmatprep.subr.mxu0 0.0
    %391 = vmatpush1.msra.mxu0 %v177
    %392 = vmatprep.subr.mxu0 0.0
    %393 = vmatpush1.msra.mxu0 %v178
    %394 = vmatprep.subr.mxu0 0.0
    %395 = vmatpush1.msra.mxu0 %v179
    %396 = vmatprep.subr.mxu0 0.0
    %397 = vmatpush1.msra.mxu0 %v180
    %398 = vmatprep.subr.mxu0 0.0
    %399 = vmatpush1.msra.mxu0 %v181
    %400 = vmatprep.subr.mxu0 0.0
    %401 = vmatpush1.msra.mxu0 %v182
    %402 = vmatprep.subr.mxu0 0.0
    %403 = vmatpush1.msra.mxu0 %v183
    %404 = vmatprep.subr.mxu0 0.0
    %405 = vmatpush1.msra.mxu0 %v184
    %406 = vmatprep.subr.mxu0 0.0
    %407 = vmatpush1.msra.mxu0 %v185
    %408 = vmatprep.subr.mxu0 0.0
    %409 = vmatpush1.msra.mxu0 %v186
    %410 = vmatprep.subr.mxu0 0.0
    %411 = vmatpush1.msra.mxu0 %v187
    %412 = vmatprep.subr.mxu0 0.0
    %413 = vmatpush1.msra.mxu0 %v188
    %414 = vmatprep.subr.mxu0 0.0
    %415 = vmatpush1.msra.mxu0 %v189
    %416 = vmatprep.subr.mxu0 0.0
    %417 = vmatpush1.msra.mxu0 %v190
    %418 = vmatprep.subr.mxu0 0.0
    %419 = vmatpush1.msra.mxu0 %v191
    %420 = vmatprep.subr.mxu0 0.0
    %421 = vmatpush1.msra.mxu0 %v192
    %422 = vmatprep.subr.mxu0 0.0
    %423 = vmatpush1.msra.mxu0 %v193
    %424 = vmatprep.subr.mxu0 0.0
    %425 = vmatpush1.msra.mxu0 %v194
    %426 = vmatprep.subr.mxu0 0.0
    %427 = vmatpush1.msra.mxu0 %v195
    %428 = vmatprep.subr.mxu0 0.0
    %429 = vmatpush1.msra.mxu0 %v196
    %430 = vmatprep.subr.mxu0 0.0
    %431 = vmatpush1.msra.mxu0 %v197
    %432 = vmatprep.subr.mxu0 0.0
    %433 = vmatpush1.msra.mxu0 %v198
    %434 = vmatprep.mubr.f32.mxu0 %v118
    %435 = vmatmul.mubr.f32.gmra.mrb[0].mxu0 %v117
    %v436 = vpop.f32.mrb[0].mxu0
    %v437 = vadd.f32 %v362, %v436
    %v438 = vpop.f32.mrb[0].mxu0
    %439 = vmatprep.mubr.f32.mxu0 %v128
    %440 = vmatmul.mubr.f32.gmra.mrb[0].mxu0 %v127
    %v441 = vpop.f32.mrb[0].mxu0
    %v442 = vadd.f32 %v367, %v441
    %v443 = vpop.f32.mrb[0].mxu0
    %444 = vdwg.mxu0
    %445 = vmatprep.subr.mxu0 0.0
    %446 = vmatpush1.msra.mxu0 %v199
    %447 = vmatprep.subr.mxu0 0.0
    %448 = vmatpush1.msra.mxu0 %v200
    %449 = vmatprep.subr.mxu0 0.0
    %450 = vmatpush1.msra.mxu0 %v201
    %451 = vmatprep.subr.mxu0 0.0
    %452 = vmatpush1.msra.mxu0 %v202
    %453 = vmatprep.subr.mxu0 0.0
    %454 = vmatpush1.msra.mxu0 %v203
    %455 = vmatprep.subr.mxu0 0.0
    %456 = vmatpush1.msra.mxu0 %v204
    %457 = vmatprep.subr.mxu0 0.0
    %458 = vmatpush1.msra.mxu0 %v205
    %459 = vmatprep.subr.mxu0 0.0
    %460 = vmatpush1.msra.mxu0 %v206
    %461 = vmatprep.subr.mxu0 0.0
    %462 = vmatpush1.msra.mxu0 %v207
    %463 = vmatprep.subr.mxu0 0.0
    %464 = vmatpush1.msra.mxu0 %v208
    %465 = vmatprep.subr.mxu0 0.0
    %466 = vmatpush1.msra.mxu0 %v209
    %467 = vmatprep.subr.mxu0 0.0
    %468 = vmatpush1.msra.mxu0 %v210
    %469 = vmatprep.subr.mxu0 0.0
    %470 = vmatpush1.msra.mxu0 %v211
    %471 = vmatprep.subr.mxu0 0.0
    %472 = vmatpush1.msra.mxu0 %v212
    %473 = vmatprep.subr.mxu0 0.0
    %474 = vmatpush1.msra.mxu0 %v213
    %475 = vmatprep.subr.mxu0 0.0
    %476 = vmatpush1.msra.mxu0 %v214
    %477 = vmatprep.subr.mxu0 0.0
    %478 = vmatpush1.msra.mxu0 %v215
    %479 = vmatprep.subr.mxu0 0.0
    %480 = vmatpush1.msra.mxu0 %v216
    %481 = vmatprep.subr.mxu0 0.0
    %482 = vmatpush1.msra.mxu0 %v217
    %483 = vmatprep.subr.mxu0 0.0
    %484 = vmatpush1.msra.mxu0 %v218
    %485 = vmatprep.subr.mxu0 0.0
    %486 = vmatpush1.msra.mxu0 %v219
    %487 = vmatprep.subr.mxu0 0.0
    %488 = vmatpush1.msra.mxu0 %v220
    %489 = vmatprep.subr.mxu0 0.0
    %490 = vmatpush1.msra.mxu0 %v221
    %491 = vmatprep.subr.mxu0 0.0
    %492 = vmatpush1.msra.mxu0 %v222
    %493 = vmatprep.subr.mxu0 0.0
    %494 = vmatpush1.msra.mxu0 %v223
    %495 = vmatprep.subr.mxu0 0.0
    %496 = vmatpush1.msra.mxu0 %v224
    %497 = vmatprep.subr.mxu0 0.0
    %498 = vmatpush1.msra.mxu0 %v225
    %499 = vmatprep.subr.mxu0 0.0
    %500 = vmatpush1.msra.mxu0 %v226
    %501 = vmatprep.subr.mxu0 0.0
    %502 = vmatpush1.msra.mxu0 %v227
    %503 = vmatprep.subr.mxu0 0.0
    %504 = vmatpush1.msra.mxu0 %v228
    %505 = vmatprep.subr.mxu0 0.0
    %506 = vmatpush1.msra.mxu0 %v229
    %507 = vmatprep.subr.mxu0 0.0
    %508 = vmatpush1.msra.mxu0 %v230
    %509 = vmatprep.mubr.f32.mxu0 %v120
    %510 = vmatmul.mubr.f32.gmra.mrb[0].mxu0 %v119
    %v511 = vpop.f32.mrb[0].mxu0
    %v512 = vadd.f32 %v437, %v511
    %v513 = vpop.f32.mrb[0].mxu0
    %514 = vmatprep.mubr.f32.mxu0 %v130
    %515 = vmatmul.mubr.f32.gmra.mrb[0].mxu0 %v129
    %v516 = vpop.f32.mrb[0].mxu0
    %v517 = vadd.f32 %v442, %v516
    %v518 = vpop.f32.mrb[0].mxu0
    %519 = vdwg.mxu0
    %520 = vmatprep.subr.mxu0 0.0
    %521 = vmatpush1.msra.mxu0 %v231
    %522 = vmatprep.subr.mxu0 0.0
    %523 = vmatpush1.msra.mxu0 %v232
    %524 = vmatprep.subr.mxu0 0.0
    %525 = vmatpush1.msra.mxu0 %v233
    %526 = vmatprep.subr.mxu0 0.0
    %527 = vmatpush1.msra.mxu0 %v234
    %528 = vmatprep.subr.mxu0 0.0
    %529 = vmatpush1.msra.mxu0 %v235
    %530 = vmatprep.subr.mxu0 0.0
    %531 = vmatpush1.msra.mxu0 %v236
    %532 = vmatprep.subr.mxu0 0.0
    %533 = vmatpush1.msra.mxu0 %v237
    %534 = vmatprep.subr.mxu0 0.0
    %535 = vmatpush1.msra.mxu0 %v238
    %536 = vmatprep.subr.mxu0 0.0
    %537 = vmatpush1.msra.mxu0 %v239
    %538 = vmatprep.subr.mxu0 0.0
    %539 = vmatpush1.msra.mxu0 %v240
    %540 = vmatprep.subr.mxu0 0.0
    %541 = vmatpush1.msra.mxu0 %v241
    %542 = vmatprep.subr.mxu0 0.0
    %543 = vmatpush1.msra.mxu0 %v242
    %544 = vmatprep.subr.mxu0 0.0
    %545 = vmatpush1.msra.mxu0 %v243
    %546 = vmatprep.subr.mxu0 0.0
    %547 = vmatpush1.msra.mxu0 %v244
    %548 = vmatprep.subr.mxu0 0.0
    %549 = vmatpush1.msra.mxu0 %v245
    %550 = vmatprep.subr.mxu0 0.0
    %551 = vmatpush1.msra.mxu0 %v246
    %552 = vmatprep.subr.mxu0 0.0
    %553 = vmatpush1.msra.mxu0 %v247
    %554 = vmatprep.subr.mxu0 0.0
    %555 = vmatpush1.msra.mxu0 %v248
    %556 = vmatprep.subr.mxu0 0.0
    %557 = vmatpush1.msra.mxu0 %v249
    %558 = vmatprep.subr.mxu0 0.0
    %559 = vmatpush1.msra.mxu0 %v250
    %560 = vmatprep.subr.mxu0 0.0
    %561 = vmatpush1.msra.mxu0 %v251
    %562 = vmatprep.subr.mxu0 0.0
    %563 = vmatpush1.msra.mxu0 %v252
    %564 = vmatprep.subr.mxu0 0.0
    %565 = vmatpush1.msra.mxu0 %v253
    %566 = vmatprep.subr.mxu0 0.0
    %567 = vmatpush1.msra.mxu0 %v254
    %568 = vmatprep.subr.mxu0 0.0
    %569 = vmatpush1.msra.mxu0 %v255
    %570 = vmatprep.subr.mxu0 0.0
    %571 = vmatpush1.msra.mxu0 %v256
    %572 = vmatprep.subr.mxu0 0.0
    %573 = vmatpush1.msra.mxu0 %v257
    %574 = vmatprep.subr.mxu0 0.0
    %575 = vmatpush1.msra.mxu0 %v258
    %576 = vmatprep.subr.mxu0 0.0
    %577 = vmatpush1.msra.mxu0 %v259
    %578 = vmatprep.subr.mxu0 0.0
    %579 = vmatpush1.msra.mxu0 %v260
    %580 = vmatprep.subr.mxu0 0.0
    %581 = vmatpush1.msra.mxu0 %v261
    %582 = vmatprep.subr.mxu0 0.0
    %583 = vmatpush1.msra.mxu0 %v262
    %584 = vmatprep.mubr.f32.mxu0 %v122
    %585 = vmatmul.mubr.f32.gmra.mrb[0].mxu0 %v121
    %v586 = vpop.f32.mrb[0].mxu0
    %v587 = vadd.f32 %v512, %v586
    %v588 = vpop.f32.mrb[0].mxu0
    %589 = vmatprep.mubr.f32.mxu0 %v132
    %590 = vmatmul.mubr.f32.gmra.mrb[0].mxu0 %v131
    %v591 = vpop.f32.mrb[0].mxu0
    %v592 = vadd.f32 %v517, %v591
    %v593 = vpop.f32.mrb[0].mxu0
    %594 = vdwg.mxu0
    %595 = vmatprep.subr.mxu0 0.0
    %596 = vmatpush1.msra.mxu0 %v263
    %597 = vmatprep.subr.mxu0 0.0
    %598 = vmatpush1.msra.mxu0 %v264
    %599 = vmatprep.subr.mxu0 0.0
    %600 = vmatpush1.msra.mxu0 %v265
    %601 = vmatprep.subr.mxu0 0.0
    %602 = vmatpush1.msra.mxu0 %v266
    %603 = vmatprep.subr.mxu0 0.0
    %604 = vmatpush1.msra.mxu0 %v267
    %605 = vmatprep.subr.mxu0 0.0
    %606 = vmatpush1.msra.mxu0 %v268
    %607 = vmatprep.subr.mxu0 0.0
    %608 = vmatpush1.msra.mxu0 %v269
    %609 = vmatprep.subr.mxu0 0.0
    %610 = vmatpush1.msra.mxu0 %v270
    %611 = vmatprep.subr.mxu0 0.0
    %612 = vmatpush1.msra.mxu0 %v271
    %613 = vmatprep.subr.mxu0 0.0
    %614 = vmatpush1.msra.mxu0 %v272
    %615 = vmatprep.subr.mxu0 0.0
    %616 = vmatpush1.msra.mxu0 %v273
    %617 = vmatprep.subr.mxu0 0.0
    %618 = vmatpush1.msra.mxu0 %v274
    %619 = vmatprep.subr.mxu0 0.0
    %620 = vmatpush1.msra.mxu0 %v275
    %621 = vmatprep.subr.mxu0 0.0
    %622 = vmatpush1.msra.mxu0 %v276
    %623 = vmatprep.subr.mxu0 0.0
    %624 = vmatpush1.msra.mxu0 %v277
    %625 = vmatprep.subr.mxu0 0.0
    %626 = vmatpush1.msra.mxu0 %v278
    %627 = vmatprep.subr.mxu0 0.0
    %628 = vmatpush1.msra.mxu0 %v279
    %629 = vmatprep.subr.mxu0 0.0
    %630 = vmatpush1.msra.mxu0 %v280
    %631 = vmatprep.subr.mxu0 0.0
    %632 = vmatpush1.msra.mxu0 %v281
    %633 = vmatprep.subr.mxu0 0.0
    %634 = vmatpush1.msra.mxu0 %v282
    %635 = vmatprep.subr.mxu0 0.0
    %636 = vmatpush1.msra.mxu0 %v283
    %637 = vmatprep.subr.mxu0 0.0
    %638 = vmatpush1.msra.mxu0 %v284
    %639 = vmatprep.subr.mxu0 0.0
    %640 = vmatpush1.msra.mxu0 %v285
    %641 = vmatprep.subr.mxu0 0.0
    %642 = vmatpush1.msra.mxu0 %v286
    %643 = vmatprep.subr.mxu0 0.0
    %644 = vmatpush1.msra.mxu0 %v287
    %645 = vmatprep.subr.mxu0 0.0
    %646 = vmatpush1.msra.mxu0 %v288
    %647 = vmatprep.subr.mxu0 0.0
    %648 = vmatpush1.msra.mxu0 %v289
    %649 = vmatprep.subr.mxu0 0.0
    %650 = vmatpush1.msra.mxu0 %v290
    %651 = vmatprep.subr.mxu0 0.0
    %652 = vmatpush1.msra.mxu0 %v291
    %653 = vmatprep.subr.mxu0 0.0
    %654 = vmatpush1.msra.mxu0 %v292
    %655 = vmatprep.subr.mxu0 0.0
    %656 = vmatpush1.msra.mxu0 %v293
    %657 = vmatprep.subr.mxu0 0.0
    %658 = vmatpush1.msra.mxu0 %v294
    %659 = vmatprep.mubr.f32.mxu0 %v124
    %660 = vmatmul.mubr.f32.gmra.mrb[0].mxu0 %v123
    %v661 = vpop.f32.mrb[0].mxu0
    %v662 = vadd.f32 %v587, %v661
    %v663 = vpop.f32.mrb[0].mxu0
    %664 = vmatprep.mubr.f32.mxu0 %v134
    %665 = vmatmul.mubr.f32.gmra.mrb[0].mxu0 %v133
    %v666 = vpop.f32.mrb[0].mxu0
    %v667 = vadd.f32 %v592, %v666
    %v668 = vpop.f32.mrb[0].mxu0
    %669 = vdwg.mxu0
    %vm670 = vcmask 146432
    %671 = vst.msk [vmem:[#allocation2] sm:$0xff] %vm670, %v662
    %672 = vst.msk [vmem:[#allocation2 + $0x8] sm:$0xff] %vm670, %v667
    // Predicated region
    $region10: #{sparse_grid_forward.1} parent=1 // pred_check
      _
    $region11: #{sparse_grid_forward.1} parent=1 // pred_check_branch
      %674 = sbr.rel (0) target = $region13
    $region12: #{sparse_grid_forward.1} parent=1 // pred_region
      %s676 = ssub.s32 256, 256
      %677 = vsyncadd [#allocation3], %s676
      %s678 = sshll.u32 [#allocation2], 4
      %s679 = int_to_ptr.vmem [resolvable:$true] %s678
      %684 = dma.vmem_to_hbm [thread:$0]  %s679, 256, %s2, [#allocation3], 128, 128, 8
    $region13: #{sparse_grid_forward.1} parent=1 // pred_fallthru
      _
    // Predicated region
    $region14: #{sparse_grid_forward.1} parent=1 // pred_check
      _
    $region15: #{sparse_grid_forward.1} parent=1 // pred_check_branch
      %686 = sbr.rel (0) target = $region17
    $region16: #{sparse_grid_forward.1} parent=1 // pred_region
      %687 = dma.done [#allocation3], 256
    $region17: #{sparse_grid_forward.1} parent=1 // pred_fallthru
      _
    %688 = vsyncpa [#allocation3], 1

</llo_original>
